<compile_context>
chip_gen: v7x
topology: tpu7x:2x2x1
jax: 0.10.0
libtpu: 0.0.40
codegen_flags: <defaults>
</compile_context>

<pallas_src>
import jax
import jax.numpy as jnp
from jax import lax
from jax.experimental import pallas as pl
from jax.experimental.pallas import tpu as pltpu


# dot_general dimension numbers:
_NT_DIMS = (((1,), (1,)), ((), ()))   # contract lhs[-1] with rhs[-1]  (RHS "transposed")
_TN_DIMS = (((0,), (0,)), ((), ()))   # contract lhs[0]  with rhs[0]   (LHS "transposed")


def _reciprocal(x):
    # EUP approximate reciprocal + one Newton step -> ~f32-exact, no VALU divide.
    r = pl.reciprocal(x, approx=True)
    return r * (2.0 - x * r)


def _softmax_last(x):
    # Softmax over the last (lane) axis.
    m = jnp.max(x, axis=-1, keepdims=True)
    e = jnp.exp(x - m)
    return e * _reciprocal(jnp.sum(e, axis=-1, keepdims=True))


def _softmax_first(x):
    # Softmax over axis 0 (sublane axis).
    m = jnp.max(x, axis=0, keepdims=True)
    e = jnp.exp(x - m)
    return e * _reciprocal(jnp.sum(e, axis=0, keepdims=True))


def sdpa_kernel(q_ref, k_ref, v_ref, out_ref):
    B, _, Dk = q_ref.shape
    Dv = v_ref.shape[-1]
    inv_dk = jnp.float32(1.0 / Dk)

    attns = []
    attn_ws = []
    # B is tiny and static -> unrolled loop; each iteration is a pair of small MXU calls.
    for b in range(B):
        q = q_ref[b] * inv_dk    # (Sq, Dk): scale folded into the small q tile
        k = k_ref[b]             # (Sk, Dk)
        v = v_ref[b]             # (Sk, Dv)

        # scores^T[j, i] = k[j] . (q[i] / Dk)  -> (Sk, Sq); feature axis contracted
        # on the MXU, no transpose ever materialized.
        scores_t = lax.dot_general(k, q, _NT_DIMS, preferred_element_type=jnp.float32)

        # torch: softmax(scores / Dk, dim=1) == softmax over the QUERY axis.
        # In this transposed layout that is the last (lane) axis -> cheap lane
        # reduction, exp + reciprocal on the EUP.
        p_t = _softmax_last(scores_t)                                   # (Sk, Sq)

        # attn[i, d] = sum_j p_t[j, i] * v[j, d]  (LHS-transposed contraction).
        attn = lax.dot_general(p_t, v, _TN_DIMS,
                               preferred_element_type=jnp.float32)      # (Sq, Dv)

        # torch: attn_w = softmax(attn, dim=1) (query axis -> sublane axis here).
        attn_w = _softmax_first(attn)                                   # (Sq, Dv)

        attns.append(attn)
        attn_ws.append(attn_w)

    # One lane-dense (Sq, 2*B*Dv) block -> single unmasked full-block store.
    fused = jnp.concatenate(attns + attn_ws, axis=-1)
    out_ref[...] = fused.astype(out_ref.dtype)


def scaled_dot_product_attention(q, k, v):
    """q: (B, Sq, Dk), k: (B, Sk, Dk), v: (B, Sk, Dv) -> (attn, attn_w), both (B, Sq, Dv)."""
    B, Sq, Dk = q.shape
    _, Sk, _ = k.shape
    Dv = v.shape[-1]

    fused = pl.pallas_call(
        sdpa_kernel,
        grid=(1,),   # whole batch in one step: no per-step pipeline overhead on 1-TC chips
        in_specs=[
            pl.BlockSpec((B, Sq, Dk), lambda i: (0, 0, 0)),   # q
            pl.BlockSpec((B, Sk, Dk), lambda i: (0, 0, 0)),   # k
            pl.BlockSpec((B, Sk, Dv), lambda i: (0, 0, 0)),   # v
        ],
        out_specs=pl.BlockSpec((Sq, 2 * B * Dv), lambda i: (0, 0)),
        out_shape=jax.ShapeDtypeStruct((Sq, 2 * B * Dv), jnp.float32),
        compiler_params=pltpu.CompilerParams(
            dimension_semantics=("arbitrary",)),
    )(q, k, v)

    # Layout plumbing back to the torch output shapes (cheap at these sizes).
    fused = fused.reshape(Sq, 2, B, Dv)               # [attn | attn_w] x batch
    attn = jnp.transpose(fused[:, 0], (1, 0, 2))      # (B, Sq, Dv)
    attn_w = jnp.transpose(fused[:, 1], (1, 0, 2))    # (B, Sq, Dv)
    return attn, attn_w


def reference(q, k, v):
    """Pure-JAX reference mirroring the torch forward exactly."""
    scores = jnp.einsum("bqd,bkd->bqk", q, k)
    p = jax.nn.softmax(scores / k.shape[-1], axis=1)   # torch dim=1 (query axis)
    attn = jnp.einsum("bqk,bkd->bqd", p, v)
    attn_w = jax.nn.softmax(attn, axis=1)              # torch dim=1
    return attn, attn_w


if __name__ == "__main__":
    B, S, D = 2, 8, 32   # batch, seq, hidden

    key = jax.random.PRNGKey(0)
    kq, kk, kv = jax.random.split(key, 3)
    q = jax.random.normal(kq, (B, S, D), jnp.float32)
    k = jax.random.normal(kk, (B, S, D), jnp.float32)
    v = jax.random.normal(kv, (B, S, D), jnp.float32)

    attn, attn_w = scaled_dot_product_attention(q, k, v)
    jax.block_until_ready((attn, attn_w))

    ref_attn, ref_attn_w = reference(q, k, v)
    assert jnp.allclose(attn, ref_attn, atol=1e-4, rtol=1e-4), \
        float(jnp.max(jnp.abs(attn - ref_attn)))
    assert jnp.allclose(attn_w, ref_attn_w, atol=1e-4, rtol=1e-4), \
        float(jnp.max(jnp.abs(attn_w - ref_attn_w)))

    print("KERNEL_OK")
</pallas_src>

<mosaic_0001>
module attributes {stable_mosaic.version = 11 : i64} {
  func.func @sdpa_kernel(%arg0: i32, %arg1: memref<2x8x32xf32, #tpu.memory_space<vmem>>, %arg2: memref<2x8x32xf32, #tpu.memory_space<vmem>>, %arg3: memref<2x8x32xf32, #tpu.memory_space<vmem>>, %arg4: memref<8x128xf32, #tpu.memory_space<vmem>>) attributes {dimension_semantics = [#tpu.dimension_semantics<arbitrary>], iteration_bounds = array<i64: 1>, scalar_prefetch = 0 : i64, scratch_operands = 0 : i64, tpu.core_type = #tpu.core_type<tc>, window_params = [{pipeline_mode = #tpu.pipeline_mode<synchronous>, transform_indices = @transform_0, window_bounds = array<i64: 2, 8, 32>}, {pipeline_mode = #tpu.pipeline_mode<synchronous>, transform_indices = @transform_1, window_bounds = array<i64: 2, 8, 32>}, {pipeline_mode = #tpu.pipeline_mode<synchronous>, transform_indices = @transform_2, window_bounds = array<i64: 2, 8, 32>}, {pipeline_mode = #tpu.pipeline_mode<synchronous>, transform_indices = @transform_3, window_bounds = array<i64: 8, 128>}]} {
    %c0 = arith.constant 0 : index
    %c0_0 = arith.constant 0 : index
    %c0_1 = arith.constant 0 : index
    %0 = vector.load %arg1[%c0, %c0_0, %c0_1] : memref<2x8x32xf32, #tpu.memory_space<vmem>>, vector<1x8x32xf32>
    %1 = vector.shape_cast %0 : vector<1x8x32xf32> to vector<8x32xf32>
    %cst = arith.constant 3.125000e-02 : f32
    %2 = vector.broadcast %cst : f32 to vector<8x32xf32>
    %3 = arith.mulf %1, %2 : vector<8x32xf32>
    %c0_2 = arith.constant 0 : index
    %c0_3 = arith.constant 0 : index
    %c0_4 = arith.constant 0 : index
    %4 = vector.load %arg2[%c0_2, %c0_3, %c0_4] : memref<2x8x32xf32, #tpu.memory_space<vmem>>, vector<1x8x32xf32>
    %5 = vector.shape_cast %4 : vector<1x8x32xf32> to vector<8x32xf32>
    %c0_5 = arith.constant 0 : index
    %c0_6 = arith.constant 0 : index
    %c0_7 = arith.constant 0 : index
    %6 = vector.load %arg3[%c0_5, %c0_6, %c0_7] : memref<2x8x32xf32, #tpu.memory_space<vmem>>, vector<1x8x32xf32>
    %7 = vector.shape_cast %6 : vector<1x8x32xf32> to vector<8x32xf32>
    %cst_8 = arith.constant dense<0.000000e+00> : vector<8x8xf32>
    %8 = tpu.matmul %5, %3, %cst_8 {dimension_numbers = #tpu.dot_dimension_numbers<[1], [1], [0], [0], [0, 0, 1, 0], [], []>} : vector<8x32xf32>, vector<8x32xf32>, vector<8x8xf32> -> vector<8x8xf32>
    %cst_9 = arith.constant dense<0xFF800000> : vector<8xf32>
    %9 = vector.multi_reduction <maximumf>, %8, %cst_9 [1] : vector<8x8xf32> to vector<8xf32>
    %10 = vector.shape_cast %9 : vector<8xf32> to vector<8x1xf32>
    %11 = vector.broadcast %10 : vector<8x1xf32> to vector<8x8xf32>
    %12 = arith.subf %8, %11 : vector<8x8xf32>
    %13 = math.exp %12 : vector<8x8xf32>
    %cst_10 = arith.constant dense<0.000000e+00> : vector<8xf32>
    %14 = vector.multi_reduction <add>, %13, %cst_10 [1] : vector<8x8xf32> to vector<8xf32>
    %15 = vector.shape_cast %14 : vector<8xf32> to vector<8x1xf32>
    %16 = tpu.reciprocal %15 {approx = true} : vector<8x1xf32> -> vector<8x1xf32>
    %17 = arith.mulf %15, %16 : vector<8x1xf32>
    %cst_11 = arith.constant 2.000000e+00 : f32
    %18 = vector.broadcast %cst_11 : f32 to vector<8x1xf32>
    %19 = arith.subf %18, %17 : vector<8x1xf32>
    %20 = arith.mulf %16, %19 : vector<8x1xf32>
    %21 = vector.broadcast %20 : vector<8x1xf32> to vector<8x8xf32>
    %22 = arith.mulf %13, %21 : vector<8x8xf32>
    %cst_12 = arith.constant dense<0.000000e+00> : vector<8x32xf32>
    %23 = tpu.matmul %22, %7, %cst_12 {dimension_numbers = #tpu.dot_dimension_numbers<[0], [0], [1], [1], [0, 1, 1, 1], [], []>} : vector<8x8xf32>, vector<8x32xf32>, vector<8x32xf32> -> vector<8x32xf32>
    %cst_13 = arith.constant dense<0xFF800000> : vector<32xf32>
    %24 = vector.multi_reduction <maximumf>, %23, %cst_13 [0] : vector<8x32xf32> to vector<32xf32>
    %25 = vector.shape_cast %24 : vector<32xf32> to vector<1x32xf32>
    %26 = vector.broadcast %25 : vector<1x32xf32> to vector<8x32xf32>
    %27 = arith.subf %23, %26 : vector<8x32xf32>
    %28 = math.exp %27 : vector<8x32xf32>
    %cst_14 = arith.constant dense<0.000000e+00> : vector<32xf32>
    %29 = vector.multi_reduction <add>, %28, %cst_14 [0] : vector<8x32xf32> to vector<32xf32>
    %30 = vector.shape_cast %29 : vector<32xf32> to vector<1x32xf32>
    %31 = tpu.reciprocal %30 {approx = true} : vector<1x32xf32> -> vector<1x32xf32>
    %32 = arith.mulf %30, %31 : vector<1x32xf32>
    %cst_15 = arith.constant 2.000000e+00 : f32
    %33 = vector.broadcast %cst_15 : f32 to vector<1x32xf32>
    %34 = arith.subf %33, %32 : vector<1x32xf32>
    %35 = arith.mulf %31, %34 : vector<1x32xf32>
    %36 = vector.broadcast %35 : vector<1x32xf32> to vector<8x32xf32>
    %37 = arith.mulf %28, %36 : vector<8x32xf32>
    %c1 = arith.constant 1 : index
    %c0_16 = arith.constant 0 : index
    %c0_17 = arith.constant 0 : index
    %38 = vector.load %arg1[%c1, %c0_16, %c0_17] : memref<2x8x32xf32, #tpu.memory_space<vmem>>, vector<1x8x32xf32>
    %39 = vector.shape_cast %38 : vector<1x8x32xf32> to vector<8x32xf32>
    %cst_18 = arith.constant 3.125000e-02 : f32
    %40 = vector.broadcast %cst_18 : f32 to vector<8x32xf32>
    %41 = arith.mulf %39, %40 : vector<8x32xf32>
    %c1_19 = arith.constant 1 : index
    %c0_20 = arith.constant 0 : index
    %c0_21 = arith.constant 0 : index
    %42 = vector.load %arg2[%c1_19, %c0_20, %c0_21] : memref<2x8x32xf32, #tpu.memory_space<vmem>>, vector<1x8x32xf32>
    %43 = vector.shape_cast %42 : vector<1x8x32xf32> to vector<8x32xf32>
    %c1_22 = arith.constant 1 : index
    %c0_23 = arith.constant 0 : index
    %c0_24 = arith.constant 0 : index
    %44 = vector.load %arg3[%c1_22, %c0_23, %c0_24] : memref<2x8x32xf32, #tpu.memory_space<vmem>>, vector<1x8x32xf32>
    %45 = vector.shape_cast %44 : vector<1x8x32xf32> to vector<8x32xf32>
    %cst_25 = arith.constant dense<0.000000e+00> : vector<8x8xf32>
    %46 = tpu.matmul %43, %41, %cst_25 {dimension_numbers = #tpu.dot_dimension_numbers<[1], [1], [0], [0], [0, 0, 1, 0], [], []>} : vector<8x32xf32>, vector<8x32xf32>, vector<8x8xf32> -> vector<8x8xf32>
    %cst_26 = arith.constant dense<0xFF800000> : vector<8xf32>
    %47 = vector.multi_reduction <maximumf>, %46, %cst_26 [1] : vector<8x8xf32> to vector<8xf32>
    %48 = vector.shape_cast %47 : vector<8xf32> to vector<8x1xf32>
    %49 = vector.broadcast %48 : vector<8x1xf32> to vector<8x8xf32>
    %50 = arith.subf %46, %49 : vector<8x8xf32>
    %51 = math.exp %50 : vector<8x8xf32>
    %cst_27 = arith.constant dense<0.000000e+00> : vector<8xf32>
    %52 = vector.multi_reduction <add>, %51, %cst_27 [1] : vector<8x8xf32> to vector<8xf32>
    %53 = vector.shape_cast %52 : vector<8xf32> to vector<8x1xf32>
    %54 = tpu.reciprocal %53 {approx = true} : vector<8x1xf32> -> vector<8x1xf32>
    %55 = arith.mulf %53, %54 : vector<8x1xf32>
    %cst_28 = arith.constant 2.000000e+00 : f32
    %56 = vector.broadcast %cst_28 : f32 to vector<8x1xf32>
    %57 = arith.subf %56, %55 : vector<8x1xf32>
    %58 = arith.mulf %54, %57 : vector<8x1xf32>
    %59 = vector.broadcast %58 : vector<8x1xf32> to vector<8x8xf32>
    %60 = arith.mulf %51, %59 : vector<8x8xf32>
    %cst_29 = arith.constant dense<0.000000e+00> : vector<8x32xf32>
    %61 = tpu.matmul %60, %45, %cst_29 {dimension_numbers = #tpu.dot_dimension_numbers<[0], [0], [1], [1], [0, 1, 1, 1], [], []>} : vector<8x8xf32>, vector<8x32xf32>, vector<8x32xf32> -> vector<8x32xf32>
    %cst_30 = arith.constant dense<0xFF800000> : vector<32xf32>
    %62 = vector.multi_reduction <maximumf>, %61, %cst_30 [0] : vector<8x32xf32> to vector<32xf32>
    %63 = vector.shape_cast %62 : vector<32xf32> to vector<1x32xf32>
    %64 = vector.broadcast %63 : vector<1x32xf32> to vector<8x32xf32>
    %65 = arith.subf %61, %64 : vector<8x32xf32>
    %66 = math.exp %65 : vector<8x32xf32>
    %cst_31 = arith.constant dense<0.000000e+00> : vector<32xf32>
    %67 = vector.multi_reduction <add>, %66, %cst_31 [0] : vector<8x32xf32> to vector<32xf32>
    %68 = vector.shape_cast %67 : vector<32xf32> to vector<1x32xf32>
    %69 = tpu.reciprocal %68 {approx = true} : vector<1x32xf32> -> vector<1x32xf32>
    %70 = arith.mulf %68, %69 : vector<1x32xf32>
    %cst_32 = arith.constant 2.000000e+00 : f32
    %71 = vector.broadcast %cst_32 : f32 to vector<1x32xf32>
    %72 = arith.subf %71, %70 : vector<1x32xf32>
    %73 = arith.mulf %69, %72 : vector<1x32xf32>
    %74 = vector.broadcast %73 : vector<1x32xf32> to vector<8x32xf32>
    %75 = arith.mulf %66, %74 : vector<8x32xf32>
    %76 = tpu.concatenate %23, %61, %37, %75 in 1 : vector<8x32xf32>, vector<8x32xf32>, vector<8x32xf32>, vector<8x32xf32> -> vector<8x128xf32>
    %c0_33 = arith.constant 0 : index
    %c0_34 = arith.constant 0 : index
    %77 = vector.load %arg4[%c0_33, %c0_34] : memref<8x128xf32, #tpu.memory_space<vmem>>, vector<8x128xf32>
    tpu.vector_store %arg4[%c0_33, %c0_34], %76 {strides = array<i32>} : memref<8x128xf32, #tpu.memory_space<vmem>>, vector<8x128xf32>,
    return
  }
  func.func @transform_0(%arg0: i32) -> (i32, i32, i32) {
    %c0_i32 = arith.constant 0 : i32
    %c0_i32_0 = arith.constant 0 : i32
    %c0_i32_1 = arith.constant 0 : i32
    %c0_i32_2 = arith.constant 0 : i32
    return %c0_i32, %c0_i32_0, %c0_i32_1 : i32, i32, i32
  }
  func.func @transform_1(%arg0: i32) -> (i32, i32, i32) {
    %c0_i32 = arith.constant 0 : i32
    %c0_i32_0 = arith.constant 0 : i32
    %c0_i32_1 = arith.constant 0 : i32
    %c0_i32_2 = arith.constant 0 : i32
    return %c0_i32, %c0_i32_0, %c0_i32_1 : i32, i32, i32
  }
  func.func @transform_2(%arg0: i32) -> (i32, i32, i32) {
    %c0_i32 = arith.constant 0 : i32
    %c0_i32_0 = arith.constant 0 : i32
    %c0_i32_1 = arith.constant 0 : i32
    %c0_i32_2 = arith.constant 0 : i32
    return %c0_i32, %c0_i32_0, %c0_i32_1 : i32, i32, i32
  }
  func.func @transform_3(%arg0: i32) -> (i32, i32) {
    %c0_i32 = arith.constant 0 : i32
    %c0_i32_0 = arith.constant 0 : i32
    %c0_i32_1 = arith.constant 0 : i32
    return %c0_i32, %c0_i32_0 : i32, i32
  }
}

</mosaic_0001>

<llo_original>
// kernel: tpu_custom_call.1
$region0: #{tpu_custom_call.1}
  #allocation0 [shape = 'u32[]', space=smem, size = 0x4, offset = 0x4, fixed_abs, tag = 'smem constant byte address 0x4 - core index']
  #allocation1 [shape = 'u32[144,128]{1,0:T(1,128)}', space=vmem, size = 0x12000, scoped, tag = 'internal scratch']
  %s0 = inlined_call_operand.hbm [shape: f32[2,8,32], index: 0, kind: input, shape index: {}]
  %s1 = inlined_call_operand.hbm [shape: f32[2,8,32], index: 1, kind: input, shape index: {}]
  %s2 = inlined_call_operand.hbm [shape: f32[2,8,32], index: 2, kind: input, shape index: {}]
  %s3 = inlined_call_operand.hbm [shape: f32[8,128], index: 3, kind: output, shape index: {}]
  %s4 = sld [smem:[#allocation0]]
  $region34: #{tpu_custom_call.1} parent=0
    _
  %s6 = ssub.s32 1, %s4
  %s7 = scalar_select 0, %s6, %s4
  $region1: #{tpu_custom_call.1} parent=0
    #allocation2 [shape = 'u8[8192]{0}', space=vmem, size = 0x2000, scoped, tag = 'input window, operand 0, single buffered']
    #allocation3 [shape = 's32[1]{0}', space=sflag, size = 0x4, scoped, tag = 'scoped memory for tpu_custom_call.1']
    #allocation4 [shape = 's32[1]{0}', space=sflag, size = 0x4, scoped, tag = 'scoped memory for tpu_custom_call.1']
    #allocation5 [shape = 'u8[8192]{0}', space=vmem, size = 0x2000, scoped, tag = 'input window, operand 1, single buffered']
    #allocation6 [shape = 's32[1]{0}', space=sflag, size = 0x4, scoped, tag = 'scoped memory for tpu_custom_call.1']
    #allocation7 [shape = 'u8[8192]{0}', space=vmem, size = 0x2000, scoped, tag = 'input window, operand 2, single buffered']
    #allocation8 [shape = 'u8[4096]{0}', space=vmem, size = 0x1000, scoped, tag = 'output window, operand 0, single buffered']
    %8 = vsyncpa [#allocation3], 0
    %9 = vsyncpa [#allocation6], 0
    %10 = vsyncpa [#allocation4], 0
    // Predicated region
    $region2: #{tpu_custom_call.1} parent=1 // pred_check
      _
    $region3: #{tpu_custom_call.1} parent=1 // pred_check_branch
      %12 = sbr.rel (0) target = $region5
    $region4: #{tpu_custom_call.1} parent=1 // pred_region
      %s14 = ssub.s32 256, 256
      %15 = vsyncadd [#allocation3], %s14
      %s16 = sshll.u32 [#allocation2], 4
      %s17 = int_to_ptr.vmem [resolvable:$true] %s16
      %22 = dma.hbm_to_vmem [thread:$0]  %s0, 256, %s17, [#allocation3], 128, 128, 8
    $region5: #{tpu_custom_call.1} parent=1 // pred_fallthru
      _
    // Predicated region
    $region6: #{tpu_custom_call.1} parent=1 // pred_check
      _
    $region7: #{tpu_custom_call.1} parent=1 // pred_check_branch
      %24 = sbr.rel (0) target = $region9
    $region8: #{tpu_custom_call.1} parent=1 // pred_region
      %s26 = ssub.s32 256, 256
      %27 = vsyncadd [#allocation6], %s26
      %s28 = sshll.u32 [#allocation5], 4
      %s29 = int_to_ptr.vmem [resolvable:$true] %s28
      %34 = dma.hbm_to_vmem [thread:$0]  %s1, 256, %s29, [#allocation6], 128, 128, 8
    $region9: #{tpu_custom_call.1} parent=1 // pred_fallthru
      _
    // Predicated region
    $region10: #{tpu_custom_call.1} parent=1 // pred_check
      _
    $region11: #{tpu_custom_call.1} parent=1 // pred_check_branch
      %36 = sbr.rel (0) target = $region13
    $region12: #{tpu_custom_call.1} parent=1 // pred_region
      %s38 = ssub.s32 256, 256
      %39 = vsyncadd [#allocation6], %s38
      %s40 = sshll.u32 [#allocation7], 4
      %s41 = int_to_ptr.vmem [resolvable:$true] %s40
      %46 = dma.hbm_to_vmem [thread:$0]  %s2, 256, %s41, [#allocation6], 128, 128, 8
    $region13: #{tpu_custom_call.1} parent=1 // pred_fallthru
      _
    // Predicated region
    $region14: #{tpu_custom_call.1} parent=1 // pred_check
      _
    $region15: #{tpu_custom_call.1} parent=1 // pred_check_branch
      %48 = sbr.rel (0) target = $region17
    $region16: #{tpu_custom_call.1} parent=1 // pred_region
      %49 = dma.done [#allocation3], 256
    $region17: #{tpu_custom_call.1} parent=1 // pred_fallthru
      _
    // Predicated region
    $region18: #{tpu_custom_call.1} parent=1 // pred_check
      _
    $region19: #{tpu_custom_call.1} parent=1 // pred_check_branch
      %51 = sbr.rel (0) target = $region21
    $region20: #{tpu_custom_call.1} parent=1 // pred_region
      %52 = dma.done [#allocation6], 256
    $region21: #{tpu_custom_call.1} parent=1 // pred_fallthru
      _
    // Predicated region
    $region22: #{tpu_custom_call.1} parent=1 // pred_check
      _
    $region23: #{tpu_custom_call.1} parent=1 // pred_check_branch
      %54 = sbr.rel (0) target = $region25
    $region24: #{tpu_custom_call.1} parent=1 // pred_region
      %55 = dma.done [#allocation6], 256
    $region25: #{tpu_custom_call.1} parent=1 // pred_fallthru
      _
    %v56 = vld [vmem:[#allocation2] sm:$0xff]
    %v57 = vmul.f32 %v56, 0.03125
    %v58 = vld [vmem:[#allocation5] sm:$0xff]
    %v59 = vld [vmem:[#allocation7] sm:$0xff]
    %vm60 = vcmask 261120
    %v62 = vsel %vm60, %v58, 0
    %v65 = vsel %vm60, %v57, 0
    %67 = vmatprep.subr.mxu0 0.0
    %68 = vmatpush1.xpose.msra.mxu0 %v65
    %69 = vmatprep.subr.mxu0 0.0
    %70 = vmatpush1.xpose.msra.mxu0 0.0
    %71 = vmatprep.subr.mxu0 0.0
    %72 = vmatpush1.xpose.msra.mxu0 0.0
    %73 = vmatprep.subr.mxu0 0.0
    %74 = vmatpush1.xpose.msra.mxu0 0.0
    %75 = vmatprep.subr.mxu0 0.0
    %76 = vmatpush1.xpose.msra.mxu0 0.0
    %77 = vmatprep.subr.mxu0 0.0
    %78 = vmatpush1.xpose.msra.mxu0 0.0
    %79 = vmatprep.subr.mxu0 0.0
    %80 = vmatpush1.xpose.msra.mxu0 0.0
    %81 = vmatprep.subr.mxu0 0.0
    %82 = vmatpush1.xpose.msra.mxu0 0.0
    %83 = vmatprep.subr.mxu0 0.0
    %84 = vmatpush1.xpose.msra.mxu0 0.0
    %85 = vmatprep.subr.mxu0 0.0
    %86 = vmatpush1.xpose.msra.mxu0 0.0
    %87 = vmatprep.subr.mxu0 0.0
    %88 = vmatpush1.xpose.msra.mxu0 0.0
    %89 = vmatprep.subr.mxu0 0.0
    %90 = vmatpush1.xpose.msra.mxu0 0.0
    %91 = vmatprep.subr.mxu0 0.0
    %92 = vmatpush1.xpose.msra.mxu0 0.0
    %93 = vmatprep.subr.mxu0 0.0
    %94 = vmatpush1.xpose.msra.mxu0 0.0
    %95 = vmatprep.subr.mxu0 0.0
    %96 = vmatpush1.xpose.msra.mxu0 0.0
    %97 = vmatprep.subr.mxu0 0.0
    %98 = vmatpush1.xpose.msra.mxu0 0.0
    %99 = vmatprep.subr.mxu0 0.0
    %100 = vmatpush1.xpose.msra.mxu0 0.0
    %101 = vmatprep.subr.mxu0 0.0
    %102 = vmatpush1.xpose.msra.mxu0 0.0
    %103 = vmatprep.subr.mxu0 0.0
    %104 = vmatpush1.xpose.msra.mxu0 0.0
    %105 = vmatprep.subr.mxu0 0.0
    %106 = vmatpush1.xpose.msra.mxu0 0.0
    %107 = vmatprep.subr.mxu0 0.0
    %108 = vmatpush1.xpose.msra.mxu0 0.0
    %109 = vmatprep.subr.mxu0 0.0
    %110 = vmatpush1.xpose.msra.mxu0 0.0
    %111 = vmatprep.subr.mxu0 0.0
    %112 = vmatpush1.xpose.msra.mxu0 0.0
    %113 = vmatprep.subr.mxu0 0.0
    %114 = vmatpush1.xpose.msra.mxu0 0.0
    %115 = vmatprep.subr.mxu0 0.0
    %116 = vmatpush1.xpose.msra.mxu0 0.0
    %117 = vmatprep.subr.mxu0 0.0
    %118 = vmatpush1.xpose.msra.mxu0 0.0
    %119 = vmatprep.subr.mxu0 0.0
    %120 = vmatpush1.xpose.msra.mxu0 0.0
    %121 = vmatprep.subr.mxu0 0.0
    %122 = vmatpush1.xpose.msra.mxu0 0.0
    %123 = vmatprep.subr.mxu0 0.0
    %124 = vmatpush1.xpose.msra.mxu0 0.0
    %125 = vmatprep.subr.mxu0 0.0
    %126 = vmatpush1.xpose.msra.mxu0 0.0
    %127 = vmatprep.subr.mxu0 0.0
    %128 = vmatpush1.xpose.msra.mxu0 0.0
    %129 = vmatprep.subr.mxu0 0.0
    %130 = vmatpush1.xpose.msra.mxu0 0.0
    %131 = vmatprep.mubr.f32.mxu0 0.0
    %132 = vmatmul.mubr.f32.gmra.mrb[0].mxu0 %v62
    %v133 = vpop.f32.mrb[0].mxu0
    %v134 = vadd.f32 0.0, %v133
    %v135 = vpop.f32.mrb[0].mxu0
    %136 = vdwg.mxu0
    %vm137 = vcmask 64512
    %v138 = vsel %vm137, %v134, -inf
    %139 = vmax.xlane.f32.xlu0 %v138
    %v140 = vpop.xlane.xlu0 %139
    %v141 = vsub.f32 %v134, %v140
    %v142 = vmul.f32 %v141, 1.442695
    %v143 = vpow.pop %v142
    %v144 = vsel %vm137, %v143, 0.0
    %145 = vadd.xlane.f32.xlu0 %v144
    %v146 = vpop.xlane.xlu0 %145
    %v147 = vrcp.pop %v146
    %v148 = vmul.f32 %v146, %v147
    %v149 = vsub.f32 2.0, %v148
    %v150 = vmul.f32 %v147, %v149
    %v151 = vmul.f32 %v143, %v150
    %152 = vxpose.xlu0.b32.start [1/16] %v151, 128
    %153 = vxpose.xlu0.b32.cont [2/16] 0.0, 128
    %154 = vxpose.xlu0.b32.cont [3/16] 0.0, 128
    %155 = vxpose.xlu0.b32.cont [4/16] 0.0, 128
    %156 = vxpose.xlu0.b32.cont [5/16] 0.0, 128
    %157 = vxpose.xlu0.b32.cont [6/16] 0.0, 128
    %158 = vxpose.xlu0.b32.cont [7/16] 0.0, 128
    %159 = vxpose.xlu0.b32.cont [8/16] 0.0, 128
    %160 = vxpose.xlu0.b32.cont [9/16] 0.0, 128
    %161 = vxpose.xlu0.b32.cont [10/16] 0.0, 128
    %162 = vxpose.xlu0.b32.cont [11/16] 0.0, 128
    %163 = vxpose.xlu0.b32.cont [12/16] 0.0, 128
    %164 = vxpose.xlu0.b32.cont [13/16] 0.0, 128
    %165 = vxpose.xlu0.b32.cont [14/16] 0.0, 128
    %166 = vxpose.xlu0.b32.cont [15/16] 0.0, 128
    %167 = vxpose.xlu0.b32.end [16/16] 0.0, 128
    %v168 = vpop.trf.xlu0
    %v169 = vpop.trf.xlu0
    %v170 = vpop.trf.xlu0
    %v171 = vpop.trf.xlu0
    %v172 = vpop.trf.xlu0
    %v173 = vpop.trf.xlu0
    %v174 = vpop.trf.xlu0
    %v175 = vpop.trf.xlu0
    %v176 = vpop.trf.xlu0
    %v177 = vpop.trf.xlu0
    %v178 = vpop.trf.xlu0
    %v179 = vpop.trf.xlu0
    %v180 = vpop.trf.xlu0
    %v181 = vpop.trf.xlu0
    %v182 = vpop.trf.xlu0
    %v183 = vpop.trf.xlu0
    %v185 = vsel %vm137, %v168, 0
    %187 = vmatprep.subr.mxu0 0.0
    %188 = vmatpush1.msra.mxu0 %v59
    %189 = vmatprep.subr.mxu0 0.0
    %190 = vmatpush1.msra.mxu0 0.0
    %191 = vmatprep.subr.mxu0 0.0
    %192 = vmatpush1.msra.mxu0 0.0
    %193 = vmatprep.subr.mxu0 0.0
    %194 = vmatpush1.msra.mxu0 0.0
    %195 = vmatprep.subr.mxu0 0.0
    %196 = vmatpush1.msra.mxu0 0.0
    %197 = vmatprep.subr.mxu0 0.0
    %198 = vmatpush1.msra.mxu0 0.0
    %199 = vmatprep.subr.mxu0 0.0
    %200 = vmatpush1.msra.mxu0 0.0
    %201 = vmatprep.subr.mxu0 0.0
    %202 = vmatpush1.msra.mxu0 0.0
    %203 = vmatprep.subr.mxu0 0.0
    %204 = vmatpush1.msra.mxu0 0.0
    %205 = vmatprep.subr.mxu0 0.0
    %206 = vmatpush1.msra.mxu0 0.0
    %207 = vmatprep.subr.mxu0 0.0
    %208 = vmatpush1.msra.mxu0 0.0
    %209 = vmatprep.subr.mxu0 0.0
    %210 = vmatpush1.msra.mxu0 0.0
    %211 = vmatprep.subr.mxu0 0.0
    %212 = vmatpush1.msra.mxu0 0.0
    %213 = vmatprep.subr.mxu0 0.0
    %214 = vmatpush1.msra.mxu0 0.0
    %215 = vmatprep.subr.mxu0 0.0
    %216 = vmatpush1.msra.mxu0 0.0
    %217 = vmatprep.subr.mxu0 0.0
    %218 = vmatpush1.msra.mxu0 0.0
    %219 = vmatprep.subr.mxu0 0.0
    %220 = vmatpush1.msra.mxu0 0.0
    %221 = vmatprep.subr.mxu0 0.0
    %222 = vmatpush1.msra.mxu0 0.0
    %223 = vmatprep.subr.mxu0 0.0
    %224 = vmatpush1.msra.mxu0 0.0
    %225 = vmatprep.subr.mxu0 0.0
    %226 = vmatpush1.msra.mxu0 0.0
    %227 = vmatprep.subr.mxu0 0.0
    %228 = vmatpush1.msra.mxu0 0.0
    %229 = vmatprep.subr.mxu0 0.0
    %230 = vmatpush1.msra.mxu0 0.0
    %231 = vmatprep.subr.mxu0 0.0
    %232 = vmatpush1.msra.mxu0 0.0
    %233 = vmatprep.subr.mxu0 0.0
    %234 = vmatpush1.msra.mxu0 0.0
    %235 = vmatprep.subr.mxu0 0.0
    %236 = vmatpush1.msra.mxu0 0.0
    %237 = vmatprep.subr.mxu0 0.0
    %238 = vmatpush1.msra.mxu0 0.0
    %239 = vmatprep.subr.mxu0 0.0
    %240 = vmatpush1.msra.mxu0 0.0
    %241 = vmatprep.subr.mxu0 0.0
    %242 = vmatpush1.msra.mxu0 0.0
    %243 = vmatprep.subr.mxu0 0.0
    %244 = vmatpush1.msra.mxu0 0.0
    %245 = vmatprep.subr.mxu0 0.0
    %246 = vmatpush1.msra.mxu0 0.0
    %247 = vmatprep.subr.mxu0 0.0
    %248 = vmatpush1.msra.mxu0 0.0
    %249 = vmatprep.subr.mxu0 0.0
    %250 = vmatpush1.msra.mxu0 0.0
    %251 = vmatprep.mubr.f32.mxu0 0.0
    %252 = vmatmul.mubr.f32.gmra.mrb[0].mxu0 %v185
    %v253 = vpop.f32.mrb[0].mxu0
    %v254 = vadd.f32 0.0, %v253
    %v255 = vpop.f32.mrb[0].mxu0
    %256 = vdwg.mxu0
    %v257 = vsel %vm60, %v254, -inf
    %v258 = vrot.slane %v257, 4
    %v259 = vmax.f32 %v257, %v258
    %v260 = vrot.slane %v259, 2
    %v261 = vmax.f32 %v259, %v260
    %v262 = vrot.slane %v261, 1
    %v263 = vmax.f32 %v261, %v262
    %v264 = vsub.f32 %v254, %v263
    %v265 = vmul.f32 %v264, 1.442695
    %v266 = vpow.pop %v265
    %v267 = vsel %vm60, %v266, 0.0
    %v268 = vrot.slane %v267, 4
    %v269 = vadd.f32 %v267, %v268
    %v270 = vrot.slane %v269, 2
    %v271 = vadd.f32 %v269, %v270
    %v272 = vrot.slane %v271, 1
    %v273 = vadd.f32 %v271, %v272
    %v274 = vrcp.pop %v273
    %v275 = vmul.f32 %v273, %v274
    %v276 = vsub.f32 2.0, %v275
    %v277 = vmul.f32 %v274, %v276
    %v278 = vmul.f32 %v266, %v277
    %s279 = scalar_lea.vmem [#allocation2], 8
    %v280 = vld [vmem:[%s279] sm:$0xff]
    %v281 = vmul.f32 %v280, 0.03125
    %s282 = scalar_lea.vmem [#allocation5], 8
    %v283 = vld [vmem:[%s282] sm:$0xff]
    %s284 = scalar_lea.vmem [#allocation7], 8
    %v285 = vld [vmem:[%s284] sm:$0xff]
    %v287 = vsel %vm60, %v283, 0
    %v290 = vsel %vm60, %v281, 0
    %292 = vmatprep.subr.mxu0 0.0
    %293 = vmatpush1.xpose.msra.mxu0 %v290
    %294 = vmatprep.subr.mxu0 0.0
    %295 = vmatpush1.xpose.msra.mxu0 0.0
    %296 = vmatprep.subr.mxu0 0.0
    %297 = vmatpush1.xpose.msra.mxu0 0.0
    %298 = vmatprep.subr.mxu0 0.0
    %299 = vmatpush1.xpose.msra.mxu0 0.0
    %300 = vmatprep.subr.mxu0 0.0
    %301 = vmatpush1.xpose.msra.mxu0 0.0
    %302 = vmatprep.subr.mxu0 0.0
    %303 = vmatpush1.xpose.msra.mxu0 0.0
    %304 = vmatprep.subr.mxu0 0.0
    %305 = vmatpush1.xpose.msra.mxu0 0.0
    %306 = vmatprep.subr.mxu0 0.0
    %307 = vmatpush1.xpose.msra.mxu0 0.0
    %308 = vmatprep.subr.mxu0 0.0
    %309 = vmatpush1.xpose.msra.mxu0 0.0
    %310 = vmatprep.subr.mxu0 0.0
    %311 = vmatpush1.xpose.msra.mxu0 0.0
    %312 = vmatprep.subr.mxu0 0.0
    %313 = vmatpush1.xpose.msra.mxu0 0.0
    %314 = vmatprep.subr.mxu0 0.0
    %315 = vmatpush1.xpose.msra.mxu0 0.0
    %316 = vmatprep.subr.mxu0 0.0
    %317 = vmatpush1.xpose.msra.mxu0 0.0
    %318 = vmatprep.subr.mxu0 0.0
    %319 = vmatpush1.xpose.msra.mxu0 0.0
    %320 = vmatprep.subr.mxu0 0.0
    %321 = vmatpush1.xpose.msra.mxu0 0.0
    %322 = vmatprep.subr.mxu0 0.0
    %323 = vmatpush1.xpose.msra.mxu0 0.0
    %324 = vmatprep.subr.mxu0 0.0
    %325 = vmatpush1.xpose.msra.mxu0 0.0
    %326 = vmatprep.subr.mxu0 0.0
    %327 = vmatpush1.xpose.msra.mxu0 0.0
    %328 = vmatprep.subr.mxu0 0.0
    %329 = vmatpush1.xpose.msra.mxu0 0.0
    %330 = vmatprep.subr.mxu0 0.0
    %331 = vmatpush1.xpose.msra.mxu0 0.0
    %332 = vmatprep.subr.mxu0 0.0
    %333 = vmatpush1.xpose.msra.mxu0 0.0
    %334 = vmatprep.subr.mxu0 0.0
    %335 = vmatpush1.xpose.msra.mxu0 0.0
    %336 = vmatprep.subr.mxu0 0.0
    %337 = vmatpush1.xpose.msra.mxu0 0.0
    %338 = vmatprep.subr.mxu0 0.0
    %339 = vmatpush1.xpose.msra.mxu0 0.0
    %340 = vmatprep.subr.mxu0 0.0
    %341 = vmatpush1.xpose.msra.mxu0 0.0
    %342 = vmatprep.subr.mxu0 0.0
    %343 = vmatpush1.xpose.msra.mxu0 0.0
    %344 = vmatprep.subr.mxu0 0.0
    %345 = vmatpush1.xpose.msra.mxu0 0.0
    %346 = vmatprep.subr.mxu0 0.0
    %347 = vmatpush1.xpose.msra.mxu0 0.0
    %348 = vmatprep.subr.mxu0 0.0
    %349 = vmatpush1.xpose.msra.mxu0 0.0
    %350 = vmatprep.subr.mxu0 0.0
    %351 = vmatpush1.xpose.msra.mxu0 0.0
    %352 = vmatprep.subr.mxu0 0.0
    %353 = vmatpush1.xpose.msra.mxu0 0.0
    %354 = vmatprep.subr.mxu0 0.0
    %355 = vmatpush1.xpose.msra.mxu0 0.0
    %356 = vmatprep.mubr.f32.mxu0 0.0
    %357 = vmatmul.mubr.f32.gmra.mrb[0].mxu0 %v287
    %v358 = vpop.f32.mrb[0].mxu0
    %v359 = vadd.f32 0.0, %v358
    %v360 = vpop.f32.mrb[0].mxu0
    %361 = vdwg.mxu0
    %v362 = vsel %vm137, %v359, -inf
    %363 = vmax.xlane.f32.xlu0 %v362
    %v364 = vpop.xlane.xlu0 %363
    %v365 = vsub.f32 %v359, %v364
    %v366 = vmul.f32 %v365, 1.442695
    %v367 = vpow.pop %v366
    %v368 = vsel %vm137, %v367, 0.0
    %369 = vadd.xlane.f32.xlu0 %v368
    %v370 = vpop.xlane.xlu0 %369
    %v371 = vrcp.pop %v370
    %v372 = vmul.f32 %v370, %v371
    %v373 = vsub.f32 2.0, %v372
    %v374 = vmul.f32 %v371, %v373
    %v375 = vmul.f32 %v367, %v374
    %376 = vxpose.xlu0.b32.start [1/16] %v375, 128
    %377 = vxpose.xlu0.b32.cont [2/16] 0.0, 128
    %378 = vxpose.xlu0.b32.cont [3/16] 0.0, 128
    %379 = vxpose.xlu0.b32.cont [4/16] 0.0, 128
    %380 = vxpose.xlu0.b32.cont [5/16] 0.0, 128
    %381 = vxpose.xlu0.b32.cont [6/16] 0.0, 128
    %382 = vxpose.xlu0.b32.cont [7/16] 0.0, 128
    %383 = vxpose.xlu0.b32.cont [8/16] 0.0, 128
    %384 = vxpose.xlu0.b32.cont [9/16] 0.0, 128
    %385 = vxpose.xlu0.b32.cont [10/16] 0.0, 128
    %386 = vxpose.xlu0.b32.cont [11/16] 0.0, 128
    %387 = vxpose.xlu0.b32.cont [12/16] 0.0, 128
    %388 = vxpose.xlu0.b32.cont [13/16] 0.0, 128
    %389 = vxpose.xlu0.b32.cont [14/16] 0.0, 128
    %390 = vxpose.xlu0.b32.cont [15/16] 0.0, 128
    %391 = vxpose.xlu0.b32.end [16/16] 0.0, 128
    %v392 = vpop.trf.xlu0
    %v393 = vpop.trf.xlu0
    %v394 = vpop.trf.xlu0
    %v395 = vpop.trf.xlu0
    %v396 = vpop.trf.xlu0
    %v397 = vpop.trf.xlu0
    %v398 = vpop.trf.xlu0
    %v399 = vpop.trf.xlu0
    %v400 = vpop.trf.xlu0
    %v401 = vpop.trf.xlu0
    %v402 = vpop.trf.xlu0
    %v403 = vpop.trf.xlu0
    %v404 = vpop.trf.xlu0
    %v405 = vpop.trf.xlu0
    %v406 = vpop.trf.xlu0
    %v407 = vpop.trf.xlu0
    %v409 = vsel %vm137, %v392, 0
    %411 = vmatprep.subr.mxu0 0.0
    %412 = vmatpush1.msra.mxu0 %v285
    %413 = vmatprep.subr.mxu0 0.0
    %414 = vmatpush1.msra.mxu0 0.0
    %415 = vmatprep.subr.mxu0 0.0
    %416 = vmatpush1.msra.mxu0 0.0
    %417 = vmatprep.subr.mxu0 0.0
    %418 = vmatpush1.msra.mxu0 0.0
    %419 = vmatprep.subr.mxu0 0.0
    %420 = vmatpush1.msra.mxu0 0.0
    %421 = vmatprep.subr.mxu0 0.0
    %422 = vmatpush1.msra.mxu0 0.0
    %423 = vmatprep.subr.mxu0 0.0
    %424 = vmatpush1.msra.mxu0 0.0
    %425 = vmatprep.subr.mxu0 0.0
    %426 = vmatpush1.msra.mxu0 0.0
    %427 = vmatprep.subr.mxu0 0.0
    %428 = vmatpush1.msra.mxu0 0.0
    %429 = vmatprep.subr.mxu0 0.0
    %430 = vmatpush1.msra.mxu0 0.0
    %431 = vmatprep.subr.mxu0 0.0
    %432 = vmatpush1.msra.mxu0 0.0
    %433 = vmatprep.subr.mxu0 0.0
    %434 = vmatpush1.msra.mxu0 0.0
    %435 = vmatprep.subr.mxu0 0.0
    %436 = vmatpush1.msra.mxu0 0.0
    %437 = vmatprep.subr.mxu0 0.0
    %438 = vmatpush1.msra.mxu0 0.0
    %439 = vmatprep.subr.mxu0 0.0
    %440 = vmatpush1.msra.mxu0 0.0
    %441 = vmatprep.subr.mxu0 0.0
    %442 = vmatpush1.msra.mxu0 0.0
    %443 = vmatprep.subr.mxu0 0.0
    %444 = vmatpush1.msra.mxu0 0.0
    %445 = vmatprep.subr.mxu0 0.0
    %446 = vmatpush1.msra.mxu0 0.0
    %447 = vmatprep.subr.mxu0 0.0
    %448 = vmatpush1.msra.mxu0 0.0
    %449 = vmatprep.subr.mxu0 0.0
    %450 = vmatpush1.msra.mxu0 0.0
    %451 = vmatprep.subr.mxu0 0.0
    %452 = vmatpush1.msra.mxu0 0.0
    %453 = vmatprep.subr.mxu0 0.0
    %454 = vmatpush1.msra.mxu0 0.0
    %455 = vmatprep.subr.mxu0 0.0
    %456 = vmatpush1.msra.mxu0 0.0
    %457 = vmatprep.subr.mxu0 0.0
    %458 = vmatpush1.msra.mxu0 0.0
    %459 = vmatprep.subr.mxu0 0.0
    %460 = vmatpush1.msra.mxu0 0.0
    %461 = vmatprep.subr.mxu0 0.0
    %462 = vmatpush1.msra.mxu0 0.0
    %463 = vmatprep.subr.mxu0 0.0
    %464 = vmatpush1.msra.mxu0 0.0
    %465 = vmatprep.subr.mxu0 0.0
    %466 = vmatpush1.msra.mxu0 0.0
    %467 = vmatprep.subr.mxu0 0.0
    %468 = vmatpush1.msra.mxu0 0.0
    %469 = vmatprep.subr.mxu0 0.0
    %470 = vmatpush1.msra.mxu0 0.0
    %471 = vmatprep.subr.mxu0 0.0
    %472 = vmatpush1.msra.mxu0 0.0
    %473 = vmatprep.subr.mxu0 0.0
    %474 = vmatpush1.msra.mxu0 0.0
    %475 = vmatprep.mubr.f32.mxu0 0.0
    %476 = vmatmul.mubr.f32.gmra.mrb[0].mxu0 %v409
    %v477 = vpop.f32.mrb[0].mxu0
    %v478 = vadd.f32 0.0, %v477
    %v479 = vpop.f32.mrb[0].mxu0
    %480 = vdwg.mxu0
    %v481 = vsel %vm60, %v478, -inf
    %v482 = vrot.slane %v481, 4
    %v483 = vmax.f32 %v481, %v482
    %v484 = vrot.slane %v483, 2
    %v485 = vmax.f32 %v483, %v484
    %v486 = vrot.slane %v485, 1
    %v487 = vmax.f32 %v485, %v486
    %v488 = vsub.f32 %v478, %v487
    %v489 = vmul.f32 %v488, 1.442695
    %v490 = vpow.pop %v489
    %v491 = vsel %vm60, %v490, 0.0
    %v492 = vrot.slane %v491, 4
    %v493 = vadd.f32 %v491, %v492
    %v494 = vrot.slane %v493, 2
    %v495 = vadd.f32 %v493, %v494
    %v496 = vrot.slane %v495, 1
    %v497 = vadd.f32 %v495, %v496
    %v498 = vrcp.pop %v497
    %v499 = vmul.f32 %v497, %v498
    %v500 = vsub.f32 2.0, %v499
    %v501 = vmul.f32 %v498, %v500
    %v502 = vmul.f32 %v490, %v501
    %504 = vrot.lane.b32.xlu0 %v478, 32
    %v505 = vpop.permute.xlu0 %504
    %508 = vrot.lane.b32.xlu0 %v278, 64
    %v509 = vpop.permute.xlu0 %508
    %512 = vrot.lane.b32.xlu0 %v502, 96
    %v513 = vpop.permute.xlu0 %512
    %v515 = vsel %vm60, %v254, %v505
    %vm516 = vcmask 523264
    %v517 = vsel %vm516, %v515, %v509
    %vm518 = vcmask 785408
    %v519 = vsel %vm518, %v517, %v513
    %520 = vst [vmem:[#allocation8] sm:$0xff] %v519
    // Predicated region
    $region26: #{tpu_custom_call.1} parent=1 // pred_check
      _
    $region27: #{tpu_custom_call.1} parent=1 // pred_check_branch
      %522 = sbr.rel (0) target = $region29
    $region28: #{tpu_custom_call.1} parent=1 // pred_region
      %s524 = ssub.s32 128, 128
      %525 = vsyncadd [#allocation4], %s524
      %s527 = sshll.u32 [#allocation8], 4
      %s528 = int_to_ptr.vmem [resolvable:$true] %s527
      %530 = dma.vmem_to_hbm [thread:$0]  %s528, 128, %s3, [#allocation4]
    $region29: #{tpu_custom_call.1} parent=1 // pred_fallthru
      _
    // Predicated region
    $region30: #{tpu_custom_call.1} parent=1 // pred_check
      _
    $region31: #{tpu_custom_call.1} parent=1 // pred_check_branch
      %532 = sbr.rel (0) target = $region33
    $region32: #{tpu_custom_call.1} parent=1 // pred_region
      %533 = dma.done [#allocation4], 128
    $region33: #{tpu_custom_call.1} parent=1 // pred_fallthru
      _
    %534 = vsyncpa [#allocation3], 1
    %535 = vsyncpa [#allocation6], 1
    %536 = vsyncpa [#allocation4], 1

</llo_original>
